<compile_context>
chip_gen: v6e
topology: v6e:2x2x1
jax: 0.10.0
libtpu: 0.0.40
codegen_flags: <defaults>
</compile_context>

<pallas_src>
import jax
import jax.numpy as jnp
from jax.experimental import pallas as pl
from jax.experimental.pallas import tpu as pltpu

EPS = 1e-5                      # nn.BatchNorm2d default eps
VMEM_LIMIT = 64 * 1024 * 1024   # explicit scoped-VMEM budget (safe for v7x's 64 MiB)


# --------------------------------------------------------------------------
# Tiling helpers
# --------------------------------------------------------------------------
def _pick_tile(dim, target, align):
    """Largest tile <= target that divides `dim` and is a multiple of `align`;
    falls back to the full dimension (a full-extent block is always legal)."""
    if dim <= target:
        return dim
    t = (target // align) * align
    while t >= align:
        if dim % t == 0:
            return t
        t -= align
    return dim


def _mosaic_params(*semantics):
    return pltpu.CompilerParams(dimension_semantics=semantics,
                                vmem_limit_bytes=VMEM_LIMIT)


# --------------------------------------------------------------------------
# Kernel 1: tiled matmul (bf16 -> f32 acc) + per-channel [sum; sumsq] accumulation
# Grid = (Cout tiles [parallel], M tiles [arbitrary]); stats block stays resident
# across the M axis and is accumulated via a VMEM scratch.
# --------------------------------------------------------------------------
def _conv_stats_kernel(x_ref, w_ref, y_ref, stats_ref, acc_ref):
    i = pl.program_id(1)                      # M axis (innermost, "arbitrary")

    @pl.when(i == 0)
    def _init():
        acc_ref[...] = jnp.zeros_like(acc_ref)

    y = jnp.dot(x_ref[...], w_ref[...], preferred_element_type=jnp.float32)
    y_ref[...] = y                            # raw conv output (f32) for sweep 2

    s = jnp.sum(y, axis=0, keepdims=True)          # (1, tc)
    sq = jnp.sum(y * y, axis=0, keepdims=True)     # (1, tc)
    row = jax.lax.broadcasted_iota(jnp.int32, acc_ref.shape, 0)
    acc_ref[...] += jnp.where(row == 0, s, jnp.where(row == 1, sq, 0.0))
    stats_ref[...] = acc_ref[...]             # resident block; last write has full sums


def conv_stats(x2d, w, *, m_tile=512, c_tile=256):
    M, K = x2d.shape
    Cout = w.shape[1]
    tm = _pick_tile(M, m_tile, 8)
    tc = _pick_tile(Cout, c_tile, 128)
    grid = (Cout // tc, M // tm)
    return pl.pallas_call(
        _conv_stats_kernel,
        grid=grid,
        in_specs=[
            pl.BlockSpec((tm, K), lambda j, i: (i, 0)),
            pl.BlockSpec((K, tc), lambda j, i: (0, j)),
        ],
        out_specs=[
            pl.BlockSpec((tm, tc), lambda j, i: (i, j)),
            pl.BlockSpec((8, tc), lambda j, i: (0, j)),
        ],
        out_shape=[
            jax.ShapeDtypeStruct((M, Cout), jnp.float32),
            jax.ShapeDtypeStruct((8, Cout), jnp.float32),
        ],
        scratch_shapes=[pltpu.VMEM((8, tc), jnp.float32)],
        compiler_params=_mosaic_params("parallel", "arbitrary"),
    )(x2d, w)


# --------------------------------------------------------------------------
# Kernel 2: folded-BN affine + ReLU (sweep 2 of bn1), emits bf16 for the next conv
# --------------------------------------------------------------------------
def _scale_relu_kernel(y_ref, sc_ref, sh_ref, o_ref):
    o_ref[...] = jnp.maximum(
        y_ref[...] * sc_ref[...] + sh_ref[...], 0.0).astype(o_ref.dtype)


def scale_relu(y, scale, shift, *, out_dtype=jnp.float32, m_tile=512):
    M, C = y.shape
    tm = _pick_tile(M, m_tile, 8)
    return pl.pallas_call(
        _scale_relu_kernel,
        grid=(M // tm,),
        in_specs=[
            pl.BlockSpec((tm, C), lambda i: (i, 0)),
            pl.BlockSpec((1, C), lambda i: (0, 0)),
            pl.BlockSpec((1, C), lambda i: (0, 0)),
        ],
        out_specs=pl.BlockSpec((tm, C), lambda i: (i, 0)),
        out_shape=jax.ShapeDtypeStruct((M, C), out_dtype),
        compiler_params=_mosaic_params("parallel"),
    )(y, scale, shift)


# --------------------------------------------------------------------------
# Kernel 3: fused bn2-normalize + ReLU + conv3 (1x1 matmul) + bn3 stats accumulation
# --------------------------------------------------------------------------
def _bn_relu_conv_stats_kernel(y_in_ref, sc_ref, sh_ref, w_ref,
                               y_ref, stats_ref, acc_ref):
    i = pl.program_id(1)

    @pl.when(i == 0)
    def _init():
        acc_ref[...] = jnp.zeros_like(acc_ref)

    h = jnp.maximum(y_in_ref[...] * sc_ref[...] + sh_ref[...], 0.0)    # f32 BN + ReLU
    y = jnp.dot(h.astype(jnp.bfloat16), w_ref[...],
                preferred_element_type=jnp.float32)
    y_ref[...] = y

    s = jnp.sum(y, axis=0, keepdims=True)
    sq = jnp.sum(y * y, axis=0, keepdims=True)
    row = jax.lax.broadcasted_iota(jnp.int32, acc_ref.shape, 0)
    acc_ref[...] += jnp.where(row == 0, s, jnp.where(row == 1, sq, 0.0))
    stats_ref[...] = acc_ref[...]


def bn_relu_conv_stats(y_in, scale, shift, w, *, m_tile=512, c_tile=256):
    M, Cmid = y_in.shape
    Cout = w.shape[1]
    tm = _pick_tile(M, m_tile, 8)
    tc = _pick_tile(Cout, c_tile, 128)
    grid = (Cout // tc, M // tm)
    return pl.pallas_call(
        _bn_relu_conv_stats_kernel,
        grid=grid,
        in_specs=[
            pl.BlockSpec((tm, Cmid), lambda j, i: (i, 0)),
            pl.BlockSpec((1, Cmid), lambda j, i: (0, 0)),
            pl.BlockSpec((1, Cmid), lambda j, i: (0, 0)),
            pl.BlockSpec((Cmid, tc), lambda j, i: (0, j)),
        ],
        out_specs=[
            pl.BlockSpec((tm, tc), lambda j, i: (i, j)),
            pl.BlockSpec((8, tc), lambda j, i: (0, j)),
        ],
        out_shape=[
            jax.ShapeDtypeStruct((M, Cout), jnp.float32),
            jax.ShapeDtypeStruct((8, Cout), jnp.float32),
        ],
        scratch_shapes=[pltpu.VMEM((8, tc), jnp.float32)],
        compiler_params=_mosaic_params("parallel", "arbitrary"),
    )(y_in, scale, shift, w)


# --------------------------------------------------------------------------
# Kernel 4: fused bn3 affine + shortcut-BN affine + residual add + ReLU
# --------------------------------------------------------------------------
def _bn_add_bn_relu_kernel(y_ref, s1_ref, b1_ref, r_ref, s2_ref, b2_ref, o_ref):
    main = y_ref[...] * s1_ref[...] + b1_ref[...]
    res = r_ref[...] * s2_ref[...] + b2_ref[...]
    o_ref[...] = jnp.maximum(main + res, 0.0)


def bn_add_bn_relu(y, s1, b1, r, s2, b2, *, m_tile=512):
    M, C = y.shape
    tm = _pick_tile(M, m_tile, 8)
    return pl.pallas_call(
        _bn_add_bn_relu_kernel,
        grid=(M // tm,),
        in_specs=[
            pl.BlockSpec((tm, C), lambda i: (i, 0)),
            pl.BlockSpec((1, C), lambda i: (0, 0)),
            pl.BlockSpec((1, C), lambda i: (0, 0)),
            pl.BlockSpec((tm, C), lambda i: (i, 0)),
            pl.BlockSpec((1, C), lambda i: (0, 0)),
            pl.BlockSpec((1, C), lambda i: (0, 0)),
        ],
        out_specs=pl.BlockSpec((tm, C), lambda i: (i, 0)),
        out_shape=jax.ShapeDtypeStruct((M, C), jnp.float32),
        compiler_params=_mosaic_params("parallel"),
    )(y, s1, b1, r, s2, b2)


# --------------------------------------------------------------------------
# BN fold: (sum, sumsq, count, gamma, beta) -> per-channel (scale, shift) in f32
# --------------------------------------------------------------------------
def _finalize_bn(stats, count, gamma, beta):
    total = stats[0]
    total_sq = stats[1]
    mean = total / count
    var = total_sq / count - mean * mean          # biased variance (torch training BN)
    inv = jax.lax.rsqrt(var + EPS)
    scale = gamma.reshape(-1) * inv
    shift = beta.reshape(-1) - mean * scale
    return scale.reshape(1, -1).astype(jnp.float32), shift.reshape(1, -1).astype(jnp.float32)


# --------------------------------------------------------------------------
# Parameter init (matches the PyTorch module's shapes; BN gamma=1, beta=0)
# --------------------------------------------------------------------------
def init_params(key, in_planes, planes, stride):
    expansion = 4
    out_planes = expansion * planes
    ks = jax.random.split(key, 4)
    params = dict(
        w1=jax.random.normal(ks[0], (in_planes, planes), jnp.float32) * 0.1,      # 1x1
        g1=jnp.ones((1, planes), jnp.float32), b1=jnp.zeros((1, planes), jnp.float32),
        w2=jax.random.normal(ks[1], (3, 3, planes, planes), jnp.float32) * 0.1,   # 3x3 HWIO
        g2=jnp.ones((1, planes), jnp.float32), b2=jnp.zeros((1, planes), jnp.float32),
        w3=jax.random.normal(ks[2], (planes, out_planes), jnp.float32) * 0.1,     # 1x1
        g3=jnp.ones((1, out_planes), jnp.float32), b3=jnp.zeros((1, out_planes), jnp.float32),
    )
    if stride != 1 or in_planes != out_planes:
        params["w_sc"] = jax.random.normal(ks[3], (in_planes, out_planes), jnp.float32) * 0.1
        params["g_sc"] = jnp.ones((1, out_planes), jnp.float32)
        params["b_sc"] = jnp.zeros((1, out_planes), jnp.float32)
    return params


# --------------------------------------------------------------------------
# Forward pass (wrapper). Input/output are NCHW like PyTorch.
# --------------------------------------------------------------------------
def bottleneck_forward(x_nchw, params, stride, *, m_tile=512, c_tile=256):
    x = jnp.transpose(x_nchw, (0, 2, 3, 1)).astype(jnp.float32)   # NCHW -> NHWC
    N, H, W, Cin = x.shape
    planes = params["w1"].shape[1]
    out_planes = params["w3"].shape[1]
    Ho = (H - 1) // stride + 1
    Wo = (W - 1) // stride + 1
    M1 = N * H * W
    M2 = N * Ho * Wo

    x_bf = x.astype(jnp.bfloat16)

    # --- conv1 (1x1) + bn1 stats (sweep 1) ---
    y1, st1 = conv_stats(x_bf.reshape(M1, Cin), params["w1"].astype(jnp.bfloat16),
                         m_tile=m_tile, c_tile=c_tile)
    sc1, sh1 = _finalize_bn(st1, M1, params["g1"], params["b1"])

    # --- bn1 normalize + relu (sweep 2), bf16 output for the next MXU pass ---
    h1 = scale_relu(y1, sc1, sh1, out_dtype=jnp.bfloat16, m_tile=m_tile)
    h1 = h1.reshape(N, H, W, planes)

    # --- conv2 (3x3, stride, pad=1) as ONE big-K matmul (K = 9*planes) + bn2 stats ---
    xp = jnp.pad(h1, ((0, 0), (1, 1), (1, 1), (0, 0)))
    cols = []
    for ky in range(3):
        for kx in range(3):
            win = jax.lax.slice(
                xp,
                (0, ky, kx, 0),
                (N, ky + stride * (Ho - 1) + 1, kx + stride * (Wo - 1) + 1, planes),
                (1, stride, stride, 1))                           # (N, Ho, Wo, planes)
            cols.append(win.reshape(M2, planes))
    patches = jnp.concatenate(cols, axis=1)                       # (M2, 9*planes) bf16
    w2_flat = params["w2"].reshape(9 * planes, planes).astype(jnp.bfloat16)
    y2, st2 = conv_stats(patches, w2_flat, m_tile=m_tile, c_tile=c_tile)
    sc2, sh2 = _finalize_bn(st2, M2, params["g2"], params["b2"])

    # --- fused bn2 normalize + relu + conv3 (1x1) + bn3 stats ---
    y3, st3 = bn_relu_conv_stats(y2, sc2, sh2, params["w3"].astype(jnp.bfloat16),
                                 m_tile=m_tile, c_tile=c_tile)
    sc3, sh3 = _finalize_bn(st3, M2, params["g3"], params["b3"])

    # --- shortcut branch ---
    if "w_sc" in params:
        xs = x_bf[:, ::stride, ::stride, :].reshape(M2, Cin)
        ysc, st_sc = conv_stats(xs, params["w_sc"].astype(jnp.bfloat16),
                                m_tile=m_tile, c_tile=c_tile)
        sc_sc, sh_sc = _finalize_bn(st_sc, M2, params["g_sc"], params["b_sc"])
    else:
        ysc = x.reshape(M2, out_planes)
        sc_sc = jnp.ones((1, out_planes), jnp.float32)
        sh_sc = jnp.zeros((1, out_planes), jnp.float32)

    # --- fused bn3 affine + shortcut-BN affine + residual add + relu ---
    out = bn_add_bn_relu(y3, sc3, sh3, ysc, sc_sc, sh_sc, m_tile=m_tile)
    out = out.reshape(N, Ho, Wo, out_planes)
    return jnp.transpose(out, (0, 3, 1, 2))                       # NHWC -> NCHW


# --------------------------------------------------------------------------
# Pure-JAX reference with matched numerics (bf16 conv inputs, f32 accumulation / BN)
# --------------------------------------------------------------------------
def bottleneck_ref(x_nchw, params, stride):
    x = jnp.transpose(x_nchw, (0, 2, 3, 1)).astype(jnp.float32)
    dn = ("NHWC", "HWIO", "NHWC")
    bf = jnp.bfloat16

    def conv(h, w, strides, padding):
        return jax.lax.conv_general_dilated(
            h.astype(bf), w.astype(bf), strides, padding,
            dimension_numbers=dn, preferred_element_type=jnp.float32)

    def bn(y, g, b):
        m = jnp.mean(y, axis=(0, 1, 2), keepdims=True)
        v = jnp.mean((y - m) ** 2, axis=(0, 1, 2), keepdims=True)
        return (y - m) * jax.lax.rsqrt(v + EPS) * g.reshape(1, 1, 1, -1) + b.reshape(1, 1, 1, -1)

    y1 = conv(x, params["w1"][None, None], (1, 1), "VALID")
    h1 = jax.nn.relu(bn(y1, params["g1"], params["b1"]))
    y2 = conv(h1, params["w2"], (stride, stride), ((1, 1), (1, 1)))
    h2 = jax.nn.relu(bn(y2, params["g2"], params["b2"]))
    y3 = conv(h2, params["w3"][None, None], (1, 1), "VALID")
    o3 = bn(y3, params["g3"], params["b3"])
    if "w_sc" in params:
        ysc = conv(x, params["w_sc"][None, None], (stride, stride), "VALID")
        sc = bn(ysc, params["g_sc"], params["b_sc"])
    else:
        sc = x
    return jnp.transpose(jax.nn.relu(o3 + sc), (0, 3, 1, 2))


if __name__ == "__main__":
    key = jax.random.PRNGKey(0)
    k_x, k_p = jax.random.split(key)

    in_planes, planes, stride = 4, 4, 2          # out channels = 16, shortcut conv active
    N, H, W = 2, 16, 16
    x = jax.random.normal(k_x, (N, in_planes, H, W), jnp.float32)   # NCHW, like PyTorch
    params = init_params(k_p, in_planes, planes, stride)

    # m_tile=128 forces a multi-tile grid (M1=512 -> 4 tiles) so the pipelined
    # stats-accumulation path is exercised even at these smoke-test shapes.
    out = bottleneck_forward(x, params, stride, m_tile=128)
    out = jax.block_until_ready(out)

    assert out.shape == (N, 4 * planes, H // stride, W // stride), out.shape

    ref = bottleneck_ref(x, params, stride)
    max_err = float(jnp.max(jnp.abs(out - ref)))
    # bf16 MXU inputs on both sides; remaining differences are accumulation-order only.
    assert max_err < 2e-2, f"max abs error vs reference: {max_err}"

    print("KERNEL_OK")
</pallas_src>

<mosaic_0001>
module attributes {stable_mosaic.version = 11 : i64} {
  func.func @_conv_stats_kernel(%arg0: i32, %arg1: i32, %arg2: memref<128x4xbf16, #tpu.memory_space<vmem>>, %arg3: memref<4x4xbf16, #tpu.memory_space<vmem>>, %arg4: memref<128x4xf32, #tpu.memory_space<vmem>>, %arg5: memref<8x4xf32, #tpu.memory_space<vmem>>, %arg6: memref<8x4xf32, #tpu.memory_space<vmem>>) attributes {dimension_semantics = [#tpu.dimension_semantics<parallel>, #tpu.dimension_semantics<arbitrary>], iteration_bounds = array<i64: 1, 4>, scalar_prefetch = 0 : i64, scratch_operands = 1 : i64, tpu.core_type = #tpu.core_type<tc>, window_params = [{transform_indices = @transform_0, window_bounds = array<i64: 128, 4>}, {transform_indices = @transform_1, window_bounds = array<i64: 4, 4>}, {transform_indices = @transform_2, window_bounds = array<i64: 128, 4>}, {transform_indices = @transform_3, window_bounds = array<i64: 8, 4>}]} {
    %c0_i32 = arith.constant 0 : i32
    %0 = arith.cmpi eq, %arg1, %c0_i32 : i32
    %1 = arith.extui %0 : i1 to i32
    %c0_i32_0 = arith.constant 0 : i32
    %2 = arith.cmpi ne, %1, %c0_i32_0 : i32
    scf.if %2 {
      %cst_18 = arith.constant 0.000000e+00 : f32
      %29 = vector.broadcast %cst_18 : f32 to vector<8x4xf32>
      %c0_19 = arith.constant 0 : index
      %c0_20 = arith.constant 0 : index
      %30 = vector.load %arg6[%c0_19, %c0_20] : memref<8x4xf32, #tpu.memory_space<vmem>>, vector<8x4xf32>
      tpu.vector_store %arg6[%c0_19, %c0_20], %29 {strides = array<i32>} : memref<8x4xf32, #tpu.memory_space<vmem>>, vector<8x4xf32>,
    } else {
    }
    %c0 = arith.constant 0 : index
    %c0_1 = arith.constant 0 : index
    %3 = vector.load %arg2[%c0, %c0_1] : memref<128x4xbf16, #tpu.memory_space<vmem>>, vector<128x4xbf16>
    %c0_2 = arith.constant 0 : index
    %c0_3 = arith.constant 0 : index
    %4 = vector.load %arg3[%c0_2, %c0_3] : memref<4x4xbf16, #tpu.memory_space<vmem>>, vector<4x4xbf16>
    %cst = arith.constant dense<0.000000e+00> : vector<128x4xf32>
    %5 = tpu.matmul %3, %4, %cst {dimension_numbers = #tpu.dot_dimension_numbers<[1], [0], [0], [1], [0, 0, 1, 1], [], []>} : vector<128x4xbf16>, vector<4x4xbf16>, vector<128x4xf32> -> vector<128x4xf32>
    %c0_4 = arith.constant 0 : index
    %c0_5 = arith.constant 0 : index
    %6 = vector.load %arg4[%c0_4, %c0_5] : memref<128x4xf32, #tpu.memory_space<vmem>>, vector<128x4xf32>
    tpu.vector_store %arg4[%c0_4, %c0_5], %5 {strides = array<i32>} : memref<128x4xf32, #tpu.memory_space<vmem>>, vector<128x4xf32>,
    %cst_6 = arith.constant dense<0.000000e+00> : vector<4xf32>
    %7 = vector.multi_reduction <add>, %5, %cst_6 [0] : vector<128x4xf32> to vector<4xf32>
    %8 = vector.shape_cast %7 : vector<4xf32> to vector<1x4xf32>
    %9 = arith.mulf %5, %5 : vector<128x4xf32>
    %cst_7 = arith.constant dense<0.000000e+00> : vector<4xf32>
    %10 = vector.multi_reduction <add>, %9, %cst_7 [0] : vector<128x4xf32> to vector<4xf32>
    %11 = vector.shape_cast %10 : vector<4xf32> to vector<1x4xf32>
    %12 = tpu.iota {dimensions = array<i32: 0>} : vector<8x4xi32>
    %c0_8 = arith.constant 0 : index
    %c0_9 = arith.constant 0 : index
    %13 = vector.load %arg6[%c0_8, %c0_9] : memref<8x4xf32, #tpu.memory_space<vmem>>, vector<8x4xf32>
    %c0_i32_10 = arith.constant 0 : i32
    %14 = vector.broadcast %c0_i32_10 : i32 to vector<8x4xi32>
    %15 = arith.cmpi eq, %12, %14 : vector<8x4xi32>
    %c1_i32 = arith.constant 1 : i32
    %16 = vector.broadcast %c1_i32 : i32 to vector<8x4xi32>
    %17 = arith.cmpi eq, %12, %16 : vector<8x4xi32>
    %cst_11 = arith.constant 0.000000e+00 : f32
    %18 = vector.shape_cast %11 : vector<1x4xf32> to vector<1x4xf32>
    %19 = vector.broadcast %18 : vector<1x4xf32> to vector<8x4xf32>
    %20 = vector.broadcast %cst_11 : f32 to vector<8x4xf32>
    %21 = arith.select %17, %19, %20 : vector<8x4xi1>, vector<8x4xf32>
    %22 = vector.shape_cast %8 : vector<1x4xf32> to vector<1x4xf32>
    %23 = vector.broadcast %22 : vector<1x4xf32> to vector<8x4xf32>
    %24 = arith.select %15, %23, %21 : vector<8x4xi1>, vector<8x4xf32>
    %25 = arith.addf %13, %24 : vector<8x4xf32>
    %c0_12 = arith.constant 0 : index
    %c0_13 = arith.constant 0 : index
    %26 = vector.load %arg6[%c0_12, %c0_13] : memref<8x4xf32, #tpu.memory_space<vmem>>, vector<8x4xf32>
    tpu.vector_store %arg6[%c0_12, %c0_13], %25 {strides = array<i32>} : memref<8x4xf32, #tpu.memory_space<vmem>>, vector<8x4xf32>,
    %c0_14 = arith.constant 0 : index
    %c0_15 = arith.constant 0 : index
    %27 = vector.load %arg6[%c0_14, %c0_15] : memref<8x4xf32, #tpu.memory_space<vmem>>, vector<8x4xf32>
    %c0_16 = arith.constant 0 : index
    %c0_17 = arith.constant 0 : index
    %28 = vector.load %arg5[%c0_16, %c0_17] : memref<8x4xf32, #tpu.memory_space<vmem>>, vector<8x4xf32>
    tpu.vector_store %arg5[%c0_16, %c0_17], %27 {strides = array<i32>} : memref<8x4xf32, #tpu.memory_space<vmem>>, vector<8x4xf32>,
    return
  }
  func.func @transform_0(%arg0: i32, %arg1: i32) -> (i32, i32) {
    %c0_i32 = arith.constant 0 : i32
    %c0_i32_0 = arith.constant 0 : i32
    return %arg1, %c0_i32 : i32, i32
  }
  func.func @transform_1(%arg0: i32, %arg1: i32) -> (i32, i32) {
    %c0_i32 = arith.constant 0 : i32
    %c0_i32_0 = arith.constant 0 : i32
    return %c0_i32, %arg0 : i32, i32
  }
  func.func @transform_2(%arg0: i32, %arg1: i32) -> (i32, i32) {
    %c0_i32 = arith.constant 0 : i32
    return %arg1, %arg0 : i32, i32
  }
  func.func @transform_3(%arg0: i32, %arg1: i32) -> (i32, i32) {
    %c0_i32 = arith.constant 0 : i32
    %c0_i32_0 = arith.constant 0 : i32
    return %c0_i32, %arg0 : i32, i32
  }
}

</mosaic_0001>

<llo_original>
// kernel: tpu_custom_call.1
$region0: #{tpu_custom_call.1}
  #allocation0 [shape = 'u32[]', space=smem, size = 0x4, offset = 0x4, fixed_abs, tag = 'smem constant byte address 0x4 - core index']
  #allocation1 [shape = 'u32[144,128]{1,0:T(1,128)}', space=vmem, size = 0x12000, scoped, tag = 'internal scratch']
  #allocation2 [shape = 'f32[8,4]{1,0:T(8,128)}', space=vmem, size = 0x1000, scoped, tag = 'scratch operand']
  %s0 = inlined_call_operand.vmem [shape: bf16[512,4], index: 0, kind: input, shape index: {}]
  %s1 = inlined_call_operand.vmem [shape: bf16[4,4], index: 1, kind: input, shape index: {}]
  %s2 = inlined_call_operand.vmem [shape: f32[512,4], index: 2, kind: output, shape index: {0}]
  %s3 = inlined_call_operand.vmem [shape: f32[8,4], index: 3, kind: output, shape index: {1}]
  %4 = xla_tuple %s2, %s3
  %s5 = sld [smem:[#allocation0]]
  $region53: #{tpu_custom_call.1} parent=0
    _
  %s7 = ssub.s32 1, %s5
  %s8 = scalar_select 0, %s7, %s5
  loop: start=0, step=1, limit=6
  $region2: #{tpu_custom_call.1} parent=0 // loop_pre_header
    _
  $region3: #{tpu_custom_call.1} parent=0 // loop_header
    %s10 = sphi 0, %s14
    %p11 = scmp.ge.s32.totalorder %s10, 6
    %s17 = sphi 0, %s29
    %s18 = sphi 0, %s25
    %s19 = sphi 0, %s17
    %s20 = sphi 0, %s18
    %s21 = sphi 0, %s19
    %s22 = sphi 0, %s20
    %s32 = sphi 0, %s34
    %s35 = sphi 0, %s32
    %s36 = sphi 0, %s35
    %s52 = sphi 0, %s36
    %s58 = sphi 0, %s60
    %s61 = sphi 0, %s58
    %s62 = sphi 0, %s61
    %s78 = sphi 0, %s62
    %s86 = sphi 0, %s88
    %s89 = sphi 0, %s86
    %s90 = sphi 0, %s89
    %s106 = sphi 0, %s90
    %s112 = sphi 0, %s114
    %s115 = sphi 0, %s112
    %s116 = sphi 0, %s115
    %s132 = sphi 0, %s116
  $region4: #{tpu_custom_call.1} parent=0 // loop_header_branch
    %13 = sbr.rel (%p11) target = $region8
  $region5: #{tpu_custom_call.1} parent=0 // loop_body
    %s15 = ssub.s32 %s10, 1
    %s16 = ssub.s32 %s10, 2
    %s23 = sadd.s32 1, %s18
    %p24 = scmp.ge.s32.totalorder %s23, 4
    %s25 = scalar_select %p24, 0, %s23
    %s26 = sadd.s32 1, %s17
    %s27 = scalar_select %p24, %s26, %s17
    %p28 = scmp.ge.s32.totalorder %s27, 1
    %s29 = scalar_select %p28, 0, %s27
    %s30 = ssub.s32 %s18, %s25
    %p31 = scmp.eq.s32.totalorder %s30, 0
    %s33 = sadd.s32 %s32, 1
    %s34 = scalar_select %p31, %s32, %s33
    %p37 = pneg %p31
    %p38 = scmp.eq.s32.totalorder %s10, 3
    %p39 = por %p37, %p38
    %p40 = scmp.ne.s32.totalorder %s32, %s35
    %p41 = scmp.eq.s32.totalorder %s10, 0
    %p42 = por %p40, %p41
    %p43 = scmp.ne.s32.totalorder %s32, %s35
    %p44 = scmp.eq.s32.totalorder %s15, 3
    %p45 = por %p43, %p44
    %p46 = scmp.ne.s32.totalorder %s35, %s36
    %p47 = scmp.eq.s32.totalorder %s15, 0
    %p48 = por %p46, %p47
    %p49 = scmp.ne.s32.totalorder %s35, %s36
    %p50 = scmp.eq.s32.totalorder %s16, 3
    %p51 = por %p49, %p50
    %p53 = scmp.ne.s32.totalorder %s36, %s52
    %p54 = scmp.eq.s32.totalorder %s16, 0
    %p55 = por %p53, %p54
    %s56 = ssub.s32 %s17, %s29
    %p57 = scmp.eq.s32.totalorder %s56, 0
    %s59 = sadd.s32 %s58, 1
    %s60 = scalar_select %p57, %s58, %s59
    %p63 = pneg %p57
    %p64 = scmp.eq.s32.totalorder %s10, 3
    %p65 = por %p63, %p64
    %p66 = scmp.ne.s32.totalorder %s58, %s61
    %p67 = scmp.eq.s32.totalorder %s10, 0
    %p68 = por %p66, %p67
    %p69 = scmp.ne.s32.totalorder %s58, %s61
    %p70 = scmp.eq.s32.totalorder %s15, 3
    %p71 = por %p69, %p70
    %p72 = scmp.ne.s32.totalorder %s61, %s62
    %p73 = scmp.eq.s32.totalorder %s15, 0
    %p74 = por %p72, %p73
    %p75 = scmp.ne.s32.totalorder %s61, %s62
    %p76 = scmp.eq.s32.totalorder %s16, 3
    %p77 = por %p75, %p76
    %p79 = scmp.ne.s32.totalorder %s62, %s78
    %p80 = scmp.eq.s32.totalorder %s16, 0
    %p81 = por %p79, %p80
    %s82 = ssub.s32 %s18, %s25
    %s83 = ssub.s32 %s17, %s29
    %s84 = sor.u32 %s82, %s83
    %p85 = scmp.eq.s32.totalorder %s84, 0
    %s87 = sadd.s32 %s86, 1
    %s88 = scalar_select %p85, %s86, %s87
    %p91 = pneg %p85
    %p92 = scmp.eq.s32.totalorder %s10, 3
    %p93 = por %p91, %p92
    %p94 = scmp.ne.s32.totalorder %s86, %s89
    %p95 = scmp.eq.s32.totalorder %s10, 0
    %p96 = por %p94, %p95
    %p97 = scmp.ne.s32.totalorder %s86, %s89
    %p98 = scmp.eq.s32.totalorder %s15, 3
    %p99 = por %p97, %p98
    %p100 = scmp.ne.s32.totalorder %s89, %s90
    %p101 = scmp.eq.s32.totalorder %s15, 0
    %p102 = por %p100, %p101
    %p103 = scmp.ne.s32.totalorder %s89, %s90
    %p104 = scmp.eq.s32.totalorder %s16, 3
    %p105 = por %p103, %p104
    %p107 = scmp.ne.s32.totalorder %s90, %s106
    %p108 = scmp.eq.s32.totalorder %s16, 0
    %p109 = por %p107, %p108
    %s110 = ssub.s32 %s17, %s29
    %p111 = scmp.eq.s32.totalorder %s110, 0
    %s113 = sadd.s32 %s112, 1
    %s114 = scalar_select %p111, %s112, %s113
    %p117 = pneg %p111
    %p118 = scmp.eq.s32.totalorder %s10, 3
    %p119 = por %p117, %p118
    %p120 = scmp.ne.s32.totalorder %s112, %s115
    %p121 = scmp.eq.s32.totalorder %s10, 0
    %p122 = por %p120, %p121
    %p123 = scmp.ne.s32.totalorder %s112, %s115
    %p124 = scmp.eq.s32.totalorder %s15, 3
    %p125 = por %p123, %p124
    %p126 = scmp.ne.s32.totalorder %s115, %s116
    %p127 = scmp.eq.s32.totalorder %s15, 0
    %p128 = por %p126, %p127
    %p129 = scmp.ne.s32.totalorder %s115, %s116
    %p130 = scmp.eq.s32.totalorder %s16, 3
    %p131 = por %p129, %p130
    %p133 = scmp.ne.s32.totalorder %s116, %s132
    %p134 = scmp.eq.s32.totalorder %s16, 0
    %p135 = por %p133, %p134
    %p136 = scmp.le.s32.totalorder 1, %s10
    %p137 = scmp.lt.s32.totalorder %s10, 5
    %p138 = pnand %p136, %p137
    %p139 = pneg %p138
    // Predicated region
    $region9: #{tpu_custom_call.1} parent=5 // pred_check
      _
    $region10: #{tpu_custom_call.1} parent=5 // pred_check_branch
      %141 = sbr.rel (%p138) target = $region12
    $region11: #{tpu_custom_call.1} parent=5 // pred_region
      %s142 = ssub.s32 %s10, 1
      // Predicated region
      $region13: #{tpu_custom_call.1} parent=11 // pred_check
        %p143 = pneg %p74
      $region14: #{tpu_custom_call.1} parent=11 // pred_check_branch
        %145 = sbr.rel (%p143) target = $region16
      $region15: #{tpu_custom_call.1} parent=11 // pred_region
        %p146 = scmp.lt.s32.totalorder %s19, 0
        %s147 = scalar_select %p146, %s19, 0
        %s148 = smul.addr %s147, 2
        %s149 = scalar_lea.vmem %s1, %s148
      $region16: #{tpu_custom_call.1} parent=11 // pred_fallthru
        _
    $region12: #{tpu_custom_call.1} parent=5 // pred_fallthru
      _
    %p150 = scmp.lt.s32.totalorder %s10, 4
    // Predicated region
    $region17: #{tpu_custom_call.1} parent=5 // pred_check
      %p151 = pneg %p150
    $region18: #{tpu_custom_call.1} parent=5 // pred_check_branch
      %153 = sbr.rel (%p151) target = $region20
    $region19: #{tpu_custom_call.1} parent=5 // pred_region
      // Predicated region
      $region21: #{tpu_custom_call.1} parent=19 // pred_check
        %p154 = pneg %p42
      $region22: #{tpu_custom_call.1} parent=19 // pred_check_branch
        %156 = sbr.rel (%p154) target = $region24
      $region23: #{tpu_custom_call.1} parent=19 // pred_region
        %s157 = smul.u32 16, %s18
        %p158 = scmp.lt.s32.totalorder %s157, 63
        %s159 = scalar_select %p158, %s157, 63
        %s160 = smul.addr %s159, 4
        %s161 = scalar_lea.vmem %s0, %s160
        %s162 = smul.u32 16, %s18
      $region24: #{tpu_custom_call.1} parent=19 // pred_fallthru
        _
    $region20: #{tpu_custom_call.1} parent=5 // pred_fallthru
      _
    %p163 = scmp.le.s32.totalorder 1, %s10
    %p164 = scmp.lt.s32.totalorder %s10, 5
    %p165 = pnand %p163, %p164
    %p166 = pneg %p165
    // Predicated region
    $region25: #{tpu_custom_call.1} parent=5 // pred_check
      _
    $region26: #{tpu_custom_call.1} parent=5 // pred_check_branch
      %168 = sbr.rel (%p165) target = $region28
    $region27: #{tpu_custom_call.1} parent=5 // pred_region
      %s169 = ssub.s32 %s10, 1
      %s170 = smul.u32 16, %s20
      %p171 = scmp.lt.s32.totalorder %s170, 63
      %s172 = scalar_select %p171, %s170, 63
      %s173 = smul.addr %s172, 4
      %s174 = scalar_lea.vmem %s0, %s173
      %p175 = pneg %p48
      %p176 = pneg %p45
      %p177 = scmp.lt.s32.totalorder %s19, 0
      %s178 = scalar_select %p177, %s19, 0
      %s179 = smul.addr %s178, 2
      %s180 = scalar_lea.vmem %s1, %s179
      %p181 = pneg %p74
      %p182 = pneg %p71
      %p183 = pneg %p102
      %p184 = pneg %p99
      %s185 = smul.u32 16, %s20
      %p186 = scmp.lt.s32.totalorder %s185, 63
      %s187 = scalar_select %p186, %s185, 63
      %p188 = scmp.lt.s32.totalorder %s19, 0
      %s189 = scalar_select %p188, %s19, 0
      %s190 = sadd.s32 %s189, %s187
      %s191 = smul.addr %s190, 8
      %s192 = scalar_lea.vmem %s2, %s191
      %p193 = pneg %p128
      %p194 = pneg %p125
      %p195 = scmp.lt.s32.totalorder %s19, 0
      %s196 = scalar_select %p195, %s19, 0
      %s197 = smul.addr %s196, 8
      %s198 = scalar_lea.vmem %s3, %s197
      %s199 = smul.u32 16, %s20
      %p200 = scmp.lt.s32.totalorder %s199, 63
      %s201 = scalar_select %p200, %s199, 63
      %s202 = smul.addr %s201, 4
      %s203 = scalar_lea.vmem %s0, %s202
      %s204 = smul.u32 16, %s20
      %p205 = scmp.lt.s32.totalorder %s19, 0
      %s206 = scalar_select %p205, %s19, 0
      %s207 = smul.addr %s206, 2
      %s208 = scalar_lea.vmem %s1, %s207
      %s209 = smul.u32 16, %s20
      %p210 = scmp.lt.s32.totalorder %s209, 63
      %s211 = scalar_select %p210, %s209, 63
      %p212 = scmp.lt.s32.totalorder %s19, 0
      %s213 = scalar_select %p212, %s19, 0
      %s214 = sadd.s32 %s213, %s211
      %s215 = smul.addr %s214, 8
      %s216 = scalar_lea.vmem %s2, %s215
      %s217 = smul.u32 16, %s20
      %p218 = scmp.lt.s32.totalorder %s19, 0
      %s219 = scalar_select %p218, %s19, 0
      %s220 = smul.addr %s219, 8
      %s221 = scalar_lea.vmem %s3, %s220
      %p223 = scmp.eq.s32.totalorder %s20, 0
      // Predicated region
      $region29: #{tpu_custom_call.1} parent=27 // pred_check
        %p224 = pneg %p223
      $region30: #{tpu_custom_call.1} parent=27 // pred_check_branch
        %226 = sbr.rel (%p224) target = $region32
      $region31: #{tpu_custom_call.1} parent=27 // pred_region
        %vm227 = vcmask 31744
        %228 = vst.msk [vmem:[#allocation2] sm:$0xff] %vm227, 0.0
      $region32: #{tpu_custom_call.1} parent=27 // pred_fallthru
        _
      %v229 = vld [vmem:[%s203] sm:$0xf]
      %v230 = vld [vmem:[%s203 + $0x4] sm:$0xf]
      %v231 = vld [vmem:[%s203 + $0x8] sm:$0xf]
      %v232 = vld [vmem:[%s203 + $0xc] sm:$0xf]
      %v233 = vld [vmem:[%s203 + $0x10] sm:$0xf]
      %v234 = vld [vmem:[%s203 + $0x14] sm:$0xf]
      %v235 = vld [vmem:[%s203 + $0x18] sm:$0xf]
      %v236 = vld [vmem:[%s203 + $0x1c] sm:$0xf]
      %v237 = vld [vmem:[%s203 + $0x20] sm:$0xf]
      %v238 = vld [vmem:[%s203 + $0x24] sm:$0xf]
      %v239 = vld [vmem:[%s203 + $0x28] sm:$0xf]
      %v240 = vld [vmem:[%s203 + $0x2c] sm:$0xf]
      %v241 = vld [vmem:[%s203 + $0x30] sm:$0xf]
      %v242 = vld [vmem:[%s203 + $0x34] sm:$0xf]
      %v243 = vld [vmem:[%s203 + $0x38] sm:$0xf]
      %v244 = vld [vmem:[%s203 + $0x3c] sm:$0xf]
      %v245 = vld [vmem:[%s208] sm:$0x3]
      %v262 = vunpack.c.l.b16 %v229
      %v263 = vunpack.c.l.b16 %v230
      %v264 = vunpack.c.l.b16 %v231
      %v265 = vunpack.c.l.b16 %v232
      %v266 = vunpack.c.l.b16 %v233
      %v267 = vunpack.c.l.b16 %v234
      %v268 = vunpack.c.l.b16 %v235
      %v269 = vunpack.c.l.b16 %v236
      %v270 = vunpack.c.l.b16 %v237
      %v271 = vunpack.c.l.b16 %v238
      %v272 = vunpack.c.l.b16 %v239
      %v273 = vunpack.c.l.b16 %v240
      %v274 = vunpack.c.l.b16 %v241
      %v275 = vunpack.c.l.b16 %v242
      %v276 = vunpack.c.l.b16 %v243
      %v277 = vunpack.c.l.b16 %v244
      %v278 = vpack.c.b16 %v263, %v262
      %v279 = vpack.c.b16 %v265, %v264
      %v280 = vpack.c.b16 %v267, %v266
      %v281 = vpack.c.b16 %v269, %v268
      %v282 = vpack.c.b16 %v271, %v270
      %v283 = vpack.c.b16 %v273, %v272
      %v284 = vpack.c.b16 %v275, %v274
      %v285 = vpack.c.b16 %v277, %v276
      %vm286 = vcmask 31744
      %v288 = vsel %vm286, %v278, 0
      %v291 = vsel %vm286, %v279, 0
      %v294 = vsel %vm286, %v280, 0
      %v297 = vsel %vm286, %v281, 0
      %v300 = vsel %vm286, %v282, 0
      %v303 = vsel %vm286, %v283, 0
      %v306 = vsel %vm286, %v284, 0
      %v309 = vsel %vm286, %v285, 0
      %vm311 = vcmask 1041408
      %v313 = vsel %vm311, %v245, 0
      %315 = vmatprep.subr.bf16.mxu0 0
      %316 = vmatpush1.bf16.msra.mxu0 0
      %317 = vmatprep.subr.bf16.mxu0 0
      %318 = vmatpush1.bf16.msra.mxu0 0
      %319 = vmatprep.subr.bf16.mxu0 0
      %320 = vmatpush1.bf16.msra.mxu0 0
      %321 = vmatprep.subr.bf16.mxu0 0
      %322 = vmatpush1.bf16.msra.mxu0 0
      %323 = vmatprep.subr.bf16.mxu0 0
      %324 = vmatpush1.bf16.msra.mxu0 0
      %325 = vmatprep.subr.bf16.mxu0 0
      %326 = vmatpush1.bf16.msra.mxu0 0
      %327 = vmatprep.subr.bf16.mxu0 0
      %328 = vmatpush1.bf16.msra.mxu0 0
      %329 = vmatprep.subr.bf16.mxu0 0
      %330 = vmatpush1.bf16.msra.mxu0 %v313
      %331 = vmatprep.subr.bf16.mxu0 0
      %332 = vmatpush2.bf16.msra.mxu0 0
      %333 = vmatprep.subr.bf16.mxu0 0
      %334 = vmatpush2.bf16.msra.mxu0 0
      %335 = vmatprep.subr.bf16.mxu0 0
      %336 = vmatpush2.bf16.msra.mxu0 0
      %337 = vmatprep.subr.bf16.mxu0 0
      %338 = vmatpush2.bf16.msra.mxu0 0
      %339 = vmatprep.subr.bf16.mxu0 0
      %340 = vmatpush2.bf16.msra.mxu0 0
      %341 = vmatprep.subr.bf16.mxu0 0
      %342 = vmatpush2.bf16.msra.mxu0 0
      %343 = vmatprep.subr.bf16.mxu0 0
      %344 = vmatpush2.bf16.msra.mxu0 0
      %345 = vmatprep.subr.bf16.mxu0 0
      %346 = vmatpush2.bf16.msra.mxu0 0
      %347 = vmatprep.mubr.bf16.mxu0 0
      %348 = vmatmul.mubr.bf16.gmra.mxu0 %v288
      %v349 = vpop.f32.mrf.mxu0
      %v350 = vadd.f32 0.0, %v349
      %v351 = vpop.f32.mrf.mxu0
      %v352 = vpop.f32.mrf.mxu0
      %v353 = vadd.f32 0.0, %v352
      %v354 = vpop.f32.mrf.mxu0
      %355 = vmatprep.mubr.bf16.mxu0 0
      %356 = vmatmul.mubr.bf16.gmra.mxu0 %v291
      %v357 = vpop.f32.mrf.mxu0
      %v358 = vadd.f32 0.0, %v357
      %v359 = vpop.f32.mrf.mxu0
      %v360 = vpop.f32.mrf.mxu0
      %v361 = vadd.f32 0.0, %v360
      %v362 = vpop.f32.mrf.mxu0
      %363 = vmatprep.mubr.bf16.mxu0 0
      %364 = vmatmul.mubr.bf16.gmra.mxu0 %v294
      %v365 = vpop.f32.mrf.mxu0
      %v366 = vadd.f32 0.0, %v365
      %v367 = vpop.f32.mrf.mxu0
      %v368 = vpop.f32.mrf.mxu0
      %v369 = vadd.f32 0.0, %v368
      %v370 = vpop.f32.mrf.mxu0
      %371 = vmatprep.mubr.bf16.mxu0 0
      %372 = vmatmul.mubr.bf16.gmra.mxu0 %v297
      %v373 = vpop.f32.mrf.mxu0
      %v374 = vadd.f32 0.0, %v373
      %v375 = vpop.f32.mrf.mxu0
      %v376 = vpop.f32.mrf.mxu0
      %v377 = vadd.f32 0.0, %v376
      %v378 = vpop.f32.mrf.mxu0
      %379 = vmatprep.mubr.bf16.mxu0 0
      %380 = vmatmul.mubr.bf16.gmra.mxu0 %v300
      %v381 = vpop.f32.mrf.mxu0
      %v382 = vadd.f32 0.0, %v381
      %v383 = vpop.f32.mrf.mxu0
      %v384 = vpop.f32.mrf.mxu0
      %v385 = vadd.f32 0.0, %v384
      %v386 = vpop.f32.mrf.mxu0
      %387 = vmatprep.mubr.bf16.mxu0 0
      %388 = vmatmul.mubr.bf16.gmra.mxu0 %v303
      %v389 = vpop.f32.mrf.mxu0
      %v390 = vadd.f32 0.0, %v389
      %v391 = vpop.f32.mrf.mxu0
      %v392 = vpop.f32.mrf.mxu0
      %v393 = vadd.f32 0.0, %v392
      %v394 = vpop.f32.mrf.mxu0
      %395 = vmatprep.mubr.bf16.mxu0 0
      %396 = vmatmul.mubr.bf16.gmra.mxu0 %v306
      %v397 = vpop.f32.mrf.mxu0
      %v398 = vadd.f32 0.0, %v397
      %v399 = vpop.f32.mrf.mxu0
      %v400 = vpop.f32.mrf.mxu0
      %v401 = vadd.f32 0.0, %v400
      %v402 = vpop.f32.mrf.mxu0
      %403 = vmatprep.mubr.bf16.mxu0 0
      %404 = vmatmul.mubr.bf16.gmra.mxu0 %v309
      %v405 = vpop.f32.mrf.mxu0
      %v406 = vadd.f32 0.0, %v405
      %v407 = vpop.f32.mrf.mxu0
      %v408 = vpop.f32.mrf.mxu0
      %v409 = vadd.f32 0.0, %v408
      %v410 = vpop.f32.mrf.mxu0
      %411 = vdwg.mxu0
      %412 = vst.msk [vmem:[%s216] sm:$0xff] %vm286, %v350
      %413 = vst.msk [vmem:[%s216 + $0x8] sm:$0xff] %vm286, %v353
      %414 = vst.msk [vmem:[%s216 + $0x10] sm:$0xff] %vm286, %v358
      %415 = vst.msk [vmem:[%s216 + $0x18] sm:$0xff] %vm286, %v361
      %416 = vst.msk [vmem:[%s216 + $0x20] sm:$0xff] %vm286, %v366
      %417 = vst.msk [vmem:[%s216 + $0x28] sm:$0xff] %vm286, %v369
      %418 = vst.msk [vmem:[%s216 + $0x30] sm:$0xff] %vm286, %v374
      %419 = vst.msk [vmem:[%s216 + $0x38] sm:$0xff] %vm286, %v377
      %420 = vst.msk [vmem:[%s216 + $0x40] sm:$0xff] %vm286, %v382
      %421 = vst.msk [vmem:[%s216 + $0x48] sm:$0xff] %vm286, %v385
      %422 = vst.msk [vmem:[%s216 + $0x50] sm:$0xff] %vm286, %v390
      %423 = vst.msk [vmem:[%s216 + $0x58] sm:$0xff] %vm286, %v393
      %424 = vst.msk [vmem:[%s216 + $0x60] sm:$0xff] %vm286, %v398
      %425 = vst.msk [vmem:[%s216 + $0x68] sm:$0xff] %vm286, %v401
      %426 = vst.msk [vmem:[%s216 + $0x70] sm:$0xff] %vm286, %v406
      %427 = vst.msk [vmem:[%s216 + $0x78] sm:$0xff] %vm286, %v409
      %v428 = vsel %vm286, %v350, 0.0
      %v429 = vsel %vm286, %v353, 0.0
      %v430 = vadd.f32 %v428, %v429
      %v431 = vsel %vm286, %v358, 0.0
      %v432 = vadd.f32 %v430, %v431
      %v433 = vsel %vm286, %v361, 0.0
      %v434 = vadd.f32 %v432, %v433
      %v435 = vsel %vm286, %v366, 0.0
      %v436 = vadd.f32 %v434, %v435
      %v437 = vsel %vm286, %v369, 0.0
      %v438 = vadd.f32 %v436, %v437
      %v439 = vsel %vm286, %v374, 0.0
      %v440 = vadd.f32 %v438, %v439
      %v441 = vsel %vm286, %v377, 0.0
      %v442 = vadd.f32 %v440, %v441
      %v443 = vsel %vm286, %v382, 0.0
      %v444 = vadd.f32 %v442, %v443
      %v445 = vsel %vm286, %v385, 0.0
      %v446 = vadd.f32 %v444, %v445
      %v447 = vsel %vm286, %v390, 0.0
      %v448 = vadd.f32 %v446, %v447
      %v449 = vsel %vm286, %v393, 0.0
      %v450 = vadd.f32 %v448, %v449
      %v451 = vsel %vm286, %v398, 0.0
      %v452 = vadd.f32 %v450, %v451
      %v453 = vsel %vm286, %v401, 0.0
      %v454 = vadd.f32 %v452, %v453
      %v455 = vsel %vm286, %v406, 0.0
      %v456 = vadd.f32 %v454, %v455
      %v457 = vsel %vm286, %v409, 0.0
      %v458 = vadd.f32 %v456, %v457
      %v459 = vrot.slane %v458, 4
      %v460 = vadd.f32 %v458, %v459
      %v461 = vrot.slane %v460, 2
      %v462 = vadd.f32 %v460, %v461
      %v463 = vrot.slane %v462, 1
      %v464 = vadd.f32 %v462, %v463
      %v465 = vmul.f32 %v350, %v350
      %v466 = vmul.f32 %v353, %v353
      %v467 = vmul.f32 %v358, %v358
      %v468 = vmul.f32 %v361, %v361
      %v469 = vmul.f32 %v366, %v366
      %v470 = vmul.f32 %v369, %v369
      %v471 = vmul.f32 %v374, %v374
      %v472 = vmul.f32 %v377, %v377
      %v473 = vmul.f32 %v382, %v382
      %v474 = vmul.f32 %v385, %v385
      %v475 = vmul.f32 %v390, %v390
      %v476 = vmul.f32 %v393, %v393
      %v477 = vmul.f32 %v398, %v398
      %v478 = vmul.f32 %v401, %v401
      %v479 = vmul.f32 %v406, %v406
      %v480 = vmul.f32 %v409, %v409
      %v481 = vsel %vm286, %v465, 0.0
      %v482 = vsel %vm286, %v466, 0.0
      %v483 = vadd.f32 %v481, %v482
      %v484 = vsel %vm286, %v467, 0.0
      %v485 = vadd.f32 %v483, %v484
      %v486 = vsel %vm286, %v468, 0.0
      %v487 = vadd.f32 %v485, %v486
      %v488 = vsel %vm286, %v469, 0.0
      %v489 = vadd.f32 %v487, %v488
      %v490 = vsel %vm286, %v470, 0.0
      %v491 = vadd.f32 %v489, %v490
      %v492 = vsel %vm286, %v471, 0.0
      %v493 = vadd.f32 %v491, %v492
      %v494 = vsel %vm286, %v472, 0.0
      %v495 = vadd.f32 %v493, %v494
      %v496 = vsel %vm286, %v473, 0.0
      %v497 = vadd.f32 %v495, %v496
      %v498 = vsel %vm286, %v474, 0.0
      %v499 = vadd.f32 %v497, %v498
      %v500 = vsel %vm286, %v475, 0.0
      %v501 = vadd.f32 %v499, %v500
      %v502 = vsel %vm286, %v476, 0.0
      %v503 = vadd.f32 %v501, %v502
      %v504 = vsel %vm286, %v477, 0.0
      %v505 = vadd.f32 %v503, %v504
      %v506 = vsel %vm286, %v478, 0.0
      %v507 = vadd.f32 %v505, %v506
      %v508 = vsel %vm286, %v479, 0.0
      %v509 = vadd.f32 %v507, %v508
      %v510 = vsel %vm286, %v480, 0.0
      %v511 = vadd.f32 %v509, %v510
      %v512 = vrot.slane %v511, 4
      %v513 = vadd.f32 %v511, %v512
      %v514 = vrot.slane %v513, 2
      %v515 = vadd.f32 %v513, %v514
      %v516 = vrot.slane %v515, 1
      %v517 = vadd.f32 %v515, %v516
      %v518 = vlaneseq
      %v519 = vshrl.u32 %v518, 7
      %v520 = vld [vmem:[#allocation2] sm:$0xff]
      %vm521 = vcmp.eq.s32.totalorder %v519, 0
      %vm522 = vcmp.eq.s32.totalorder %v519, 1
      %v523 = vsel %vm522, %v517, 0.0
      %v524 = vsel %vm521, %v464, %v523
      %v525 = vadd.f32 %v520, %v524
      %526 = vst.msk [vmem:[#allocation2] sm:$0xff] %vm286, %v525
      %v527 = vld [vmem:[#allocation2] sm:$0xff]
      %528 = vst.msk [vmem:[%s221] sm:$0xff] %vm286, %v527
      %s529 = smul.u32 16, %s20
      %p530 = scmp.lt.s32.totalorder %s529, 63
      %s531 = scalar_select %p530, %s529, 63
      %p532 = scmp.lt.s32.totalorder %s19, 0
      %s533 = scalar_select %p532, %s19, 0
      %s534 = sadd.s32 %s533, %s531
      %s535 = smul.addr %s534, 8
      %s536 = scalar_lea.vmem %s2, %s535
      %p537 = scmp.lt.s32.totalorder %s19, 0
      %s538 = scalar_select %p537, %s19, 0
      %s539 = smul.addr %s538, 8
      %s540 = scalar_lea.vmem %s3, %s539
      // Predicated region
      $region33: #{tpu_custom_call.1} parent=27 // pred_check
        %p541 = pneg %p99
      $region34: #{tpu_custom_call.1} parent=27 // pred_check_branch
        %543 = sbr.rel (%p541) target = $region36
      $region35: #{tpu_custom_call.1} parent=27 // pred_region
        %s544 = smul.u32 16, %s20
      $region36: #{tpu_custom_call.1} parent=27 // pred_fallthru
        _
      // Predicated region
      $region37: #{tpu_custom_call.1} parent=27 // pred_check
        %p545 = pneg %p125
      $region38: #{tpu_custom_call.1} parent=27 // pred_check_branch
        %547 = sbr.rel (%p545) target = $region40
      $region39: #{tpu_custom_call.1} parent=27 // pred_region
        _
      $region40: #{tpu_custom_call.1} parent=27 // pred_fallthru
        _
      // Predicated region
      $region41: #{tpu_custom_call.1} parent=27 // pred_check
        %p548 = pneg %p125
      $region42: #{tpu_custom_call.1} parent=27 // pred_check_branch
        %550 = sbr.rel (%p548) target = $region44
      $region43: #{tpu_custom_call.1} parent=27 // pred_region
        %p551 = scmp.lt.s32.totalorder %s19, 0
        %s552 = scalar_select %p551, %s19, 0
        %s553 = smul.addr %s552, 8
        %s554 = scalar_lea.vmem %s3, %s553
      $region44: #{tpu_custom_call.1} parent=27 // pred_fallthru
        _
    $region28: #{tpu_custom_call.1} parent=5 // pred_fallthru
      _
    %p555 = scmp.le.s32.totalorder 2, %s10
    // Predicated region
    $region45: #{tpu_custom_call.1} parent=5 // pred_check
      %p556 = pneg %p555
    $region46: #{tpu_custom_call.1} parent=5 // pred_check_branch
      %558 = sbr.rel (%p556) target = $region48
    $region47: #{tpu_custom_call.1} parent=5 // pred_region
      %s559 = ssub.s32 %s10, 2
      // Predicated region
      $region49: #{tpu_custom_call.1} parent=47 // pred_check
        %p560 = pneg %p105
      $region50: #{tpu_custom_call.1} parent=47 // pred_check_branch
        %562 = sbr.rel (%p560) target = $region52
      $region51: #{tpu_custom_call.1} parent=47 // pred_region
        %s563 = smul.u32 16, %s22
        %p564 = scmp.lt.s32.totalorder %s563, 63
        %s565 = scalar_select %p564, %s563, 63
        %p566 = scmp.lt.s32.totalorder %s21, 0
        %s567 = scalar_select %p566, %s21, 0
        %s568 = sadd.s32 %s567, %s565
        %s569 = smul.addr %s568, 8
        %s570 = scalar_lea.vmem %s2, %s569
      $region52: #{tpu_custom_call.1} parent=47 // pred_fallthru
        _
    $region48: #{tpu_custom_call.1} parent=5 // pred_fallthru
      _
  $region6: #{tpu_custom_call.1} parent=0 // loop_footer
    %s14 = sadd.s32 1, %s10
  $region7: #{tpu_custom_call.1} parent=0 // loop_footer_branch
    %9 = sbr.rel target = $region3
  $region8: #{tpu_custom_call.1} parent=0 // loop_exit
    _

</llo_original>
